<compile_context>
chip_gen: v7x
topology: tpu7x:2x2x1
jax: 0.10.0
libtpu: 0.0.40
codegen_flags: <defaults>
</compile_context>

<pallas_src>
import functools
import math

import jax
import jax.numpy as jnp
from jax.experimental import pallas as pl
from jax.experimental.pallas import tpu as pltpu

LANE = 128              # vreg lane count; last dim of every block
SUBLANE_32BIT = 8       # sublane granularity for 32-bit dtypes
_QUARTER_PI = float(math.pi / 4.0)
_SQRT2 = float(math.sqrt(2.0))
_DEFAULT_BLOCK_BYTES = 2 * 1024 * 1024   # ~2 MiB per operand per grid step


def _sincos_kernel(x_ref, o_ref, *, folded_scale):
    # x_ref / o_ref: (block_rows, LANE) tiles in VMEM.
    x = x_ref[...].astype(jnp.float32)
    # sin(x) + cos(x) == sqrt(2) * sin(x + pi/4); sqrt(2)*scale is folded_scale.
    o_ref[...] = (folded_scale * jnp.sin(x + _QUARTER_PI)).astype(o_ref.dtype)


def sine_cosine(x: jax.Array, scale: float = 1.0,
                block_bytes: int = _DEFAULT_BLOCK_BYTES) -> jax.Array:
    """Computes scale * (sin(x) + cos(x)) with a Pallas TPU kernel.

    `scale` must be a static Python float (it is a module constant in the
    reference PyTorch module) — it is folded into the kernel at trace time.
    """
    orig_shape = x.shape
    orig_dtype = x.dtype
    n = x.size
    if n == 0:
        return x

    # Lane-dense 2-D slab. For n % 128 == 0 this is a pure view (zero copy).
    flat = jnp.ravel(x)
    lane_pad = (-n) % LANE
    if lane_pad:
        # Rare fallback path (see TODO above).
        flat = jnp.pad(flat, (0, lane_pad))
    rows = (n + lane_pad) // LANE
    slab = flat.reshape(rows, LANE)

    itemsize = jnp.dtype(orig_dtype).itemsize
    # Sub-32-bit dtypes pack along sublanes -> coarser sublane granularity.
    sublane = SUBLANE_32BIT * max(1, 4 // itemsize)
    # Constant-byte blocks: same ~block_bytes per step for f32 / bf16 / int8.
    max_block_rows = max(sublane, block_bytes // (LANE * itemsize))

    if rows > 2 * sublane:
        # At least 2 (and preferably an even number of) grid steps so the
        # "parallel" axis can be split across v7x's two TensorCores.
        num_blocks = pl.cdiv(rows, max_block_rows)
        num_blocks = max(2, num_blocks + (num_blocks % 2))
        block_rows = pl.cdiv(pl.cdiv(rows, num_blocks), sublane) * sublane
    else:
        # Tiny input: one full-extent block (full-dim block bypasses the
        # (8, 128) divisibility requirement).
        block_rows = rows
    grid = (pl.cdiv(rows, block_rows),)   # ragged last block masked by Pallas

    kernel = functools.partial(
        _sincos_kernel, folded_scale=float(scale) * _SQRT2)

    out = pl.pallas_call(
        kernel,
        out_shape=jax.ShapeDtypeStruct((rows, LANE), orig_dtype),
        grid=grid,
        in_specs=[pl.BlockSpec((block_rows, LANE), lambda i: (i, 0))],
        out_specs=pl.BlockSpec((block_rows, LANE), lambda i: (i, 0)),
        compiler_params=pltpu.CompilerParams(
            dimension_semantics=(pltpu.PARALLEL,),
            vmem_limit_bytes=32 * 1024 * 1024,
        ),
        cost_estimate=pl.CostEstimate(
            flops=3 * n,                       # add, mul, cast-ish per element
            transcendentals=n,                 # one sin per element
            bytes_accessed=2 * n * itemsize,   # one read + one write
        ),
    )(slab)

    if lane_pad:
        return out.reshape(-1)[:n].reshape(orig_shape)
    return out.reshape(orig_shape)


if __name__ == "__main__":
    scale = 1.5
    fn = jax.jit(sine_cosine, static_argnames=("scale", "block_bytes"))

    # Primary check: shape matching typical use of the PyTorch module.
    x = jax.random.normal(jax.random.PRNGKey(0), (2, 4, 16, 16), dtype=jnp.float32)
    y = jax.block_until_ready(fn(x, scale=scale))
    y_ref = scale * (jnp.sin(x) + jnp.cos(x))
    assert y.shape == x.shape and y.dtype == x.dtype
    assert jnp.allclose(y, y_ref, atol=1e-5, rtol=1e-5)

    # Multi-block / ragged-grid check (rows=20 -> two blocks, last one partial).
    x3 = jax.random.normal(jax.random.PRNGKey(2), (2, 4, 16, 20), dtype=jnp.float32)
    y3 = jax.block_until_ready(fn(x3, scale=scale))
    assert jnp.allclose(y3, scale * (jnp.sin(x3) + jnp.cos(x3)), atol=1e-5, rtol=1e-5)

    # Misaligned-size fallback check (size not divisible by 128).
    x2 = jax.random.normal(jax.random.PRNGKey(1), (3, 5, 17, 13), dtype=jnp.float32)
    y2 = jax.block_until_ready(fn(x2, scale=scale))
    assert jnp.allclose(y2, scale * (jnp.sin(x2) + jnp.cos(x2)), atol=1e-5, rtol=1e-5)

    # bf16 check (constant-byte block sizing, f32 compute, cast on store).
    xb = jax.random.normal(jax.random.PRNGKey(3), (4, 256), dtype=jnp.bfloat16)
    yb = jax.block_until_ready(fn(xb, scale=scale))
    xb32 = xb.astype(jnp.float32)
    yb_ref = (scale * (jnp.sin(xb32) + jnp.cos(xb32))).astype(jnp.bfloat16)
    assert yb.dtype == jnp.bfloat16
    assert jnp.allclose(yb.astype(jnp.float32), yb_ref.astype(jnp.float32),
                        atol=2e-2, rtol=2e-2)

    print("KERNEL_OK")
</pallas_src>

<mosaic_0001>
module attributes {stable_mosaic.version = 11 : i64} {
  func.func @_sincos_kernel(%arg0: i32, %arg1: memref<16x128xf32, #tpu.memory_space<vmem>>, %arg2: memref<16x128xf32, #tpu.memory_space<vmem>>) attributes {dimension_semantics = [#tpu.dimension_semantics<parallel>], iteration_bounds = array<i64: 1>, scalar_prefetch = 0 : i64, scratch_operands = 0 : i64, tpu.core_type = #tpu.core_type<tc>, window_params = [{transform_indices = @transform_0, window_bounds = array<i64: 16, 128>}, {transform_indices = @transform_1, window_bounds = array<i64: 16, 128>}]} {
    %c0 = arith.constant 0 : index
    %c0_0 = arith.constant 0 : index
    %0 = vector.load %arg1[%c0, %c0_0] : memref<16x128xf32, #tpu.memory_space<vmem>>, vector<16x128xf32>
    %cst = arith.constant 0.785398185 : f32
    %1 = vector.broadcast %cst : f32 to vector<16x128xf32>
    %2 = arith.addf %0, %1 : vector<16x128xf32>
    %3 = math.sin %2 : vector<16x128xf32>
    %cst_1 = arith.constant 2.12132025 : f32
    %4 = vector.broadcast %cst_1 : f32 to vector<16x128xf32>
    %5 = arith.mulf %4, %3 : vector<16x128xf32>
    %c0_2 = arith.constant 0 : index
    %c0_3 = arith.constant 0 : index
    %6 = vector.load %arg2[%c0_2, %c0_3] : memref<16x128xf32, #tpu.memory_space<vmem>>, vector<16x128xf32>
    tpu.vector_store %arg2[%c0_2, %c0_3], %5 {strides = array<i32>} : memref<16x128xf32, #tpu.memory_space<vmem>>, vector<16x128xf32>,
    return
  }
  func.func @transform_0(%arg0: i32) -> (i32, i32) {
    %c0_i32 = arith.constant 0 : i32
    %c0_i32_0 = arith.constant 0 : i32
    return %arg0, %c0_i32 : i32, i32
  }
  func.func @transform_1(%arg0: i32) -> (i32, i32) {
    %c0_i32 = arith.constant 0 : i32
    %c0_i32_0 = arith.constant 0 : i32
    return %arg0, %c0_i32 : i32, i32
  }
}

</mosaic_0001>

<llo_original>
// kernel: sine_cosine.1
$region0: #{sine_cosine.1}
  #allocation0 [shape = 'u32[]', space=smem, size = 0x4, offset = 0x4, fixed_abs, tag = 'smem constant byte address 0x4 - core index']
  #allocation1 [shape = 'u32[144,128]{1,0:T(1,128)}', space=vmem, size = 0x12000, scoped, tag = 'internal scratch']
  %s0 = inlined_call_operand.vmem [shape: f32[16,128], index: 0, kind: input, shape index: {}]
  %s1 = inlined_call_operand.vmem [shape: f32[16,128], index: 1, kind: output, shape index: {}]
  %s2 = sld [smem:[#allocation0]]
  $region14: #{sine_cosine.1} parent=0
    _
  %s4 = ssub.s32 1, %s2
  %s5 = scalar_select 0, %s4, %s2
  // Predicated region
  $region2: #{sine_cosine.1} parent=0 // pred_check
    _
  $region3: #{sine_cosine.1} parent=0 // pred_check_branch
    %7 = sbr.rel (0) target = $region5
  $region4: #{sine_cosine.1} parent=0 // pred_region
    _
  $region5: #{sine_cosine.1} parent=0 // pred_fallthru
    _
  %v8 = vld [vmem:[%s0] sm:$0xff]
  %v9 = vld [vmem:[%s0 + $0x8] sm:$0xff]
  %v10 = vadd.f32 %v8, 0.7853982
  %v11 = vadd.f32 %v9, 0.7853982
  %v12 = vand.u32 2147483647, %v10
  %vm13 = vcmp.le.f32.partialorder %v12, 0.7853982
  %vm14 = vcmp.lt.s32.totalorder %v10, 0
  %v15 = vand.u32 %v10, 2139095040
  %v16 = vshrl.u32 %v15, 23
  %v17 = vsub.s32 %v16, 127
  %v18 = vand.u32 2147483647, %v10
  %v19 = vand.u32 %v18, 8388607
  %v20 = vor.u32 %v19, 8388608
  %v21 = vsub.s32 0, %v20
  %v22 = vadd.s32 %v17, 1
  %vm23 = vcmp.gt.s32.totalorder %v22, 0
  %v24 = vsel %vm23, %v22, 0
  %v25 = vshrl.u32 %v24, 5
  %v26 = vand.u32 %v24, 31
  %v27 = vsub.s32 32, %v26
  %v28 = vshrl.u32 683565275, %v27
  %v29 = vshll.u32 683565275, %v26
  %v30 = vshrl.u32 2475754826, %v27
  %v31 = vor.u32 %v29, %v30
  %v32 = vshll.u32 2475754826, %v26
  %v33 = vshrl.u32 2131351028, %v27
  %v34 = vor.u32 %v32, %v33
  %v35 = vshll.u32 2131351028, %v26
  %v36 = vshrl.u32 2102212464, %v27
  %v37 = vor.u32 %v35, %v36
  %v38 = vshll.u32 2102212464, %v26
  %v39 = vshrl.u32 920167782, %v27
  %v40 = vor.u32 %v38, %v39
  %v41 = vshll.u32 920167782, %v26
  %v42 = vshrl.u32 1326507024, %v27
  %v43 = vor.u32 %v41, %v42
  %vm44 = vcmp.lt.s32.totalorder %v25, 1
  %vm45 = vcmp.lt.s32.totalorder %v25, 2
  %vm46 = vcmp.lt.s32.totalorder %v25, 3
  %vm47 = vcmp.lt.s32.totalorder %v25, 4
  %v48 = vsel %vm44, %v28, %v31
  %v49 = vsel %vm47, %v37, 2102212464
  %v50 = vsel %vm46, %v34, %v49
  %v51 = vsel %vm45, %v48, %v50
  %v52 = vsel %vm44, %v31, %v34
  %v53 = vsel %vm47, %v40, 920167782
  %v54 = vsel %vm46, %v37, %v53
  %v55 = vsel %vm45, %v52, %v54
  %v56 = vsel %vm44, %v34, %v37
  %v57 = vsel %vm47, %v43, 1326507024
  %v58 = vsel %vm46, %v40, %v57
  %v59 = vsel %vm45, %v56, %v58
  %v60 = vshll.u32 %v20, 8
  %v61 = vmul.u32.u64.compose %v60, %v59
  %v62 = vextract.low.u32 %v61
  %v63 = vextract.high.u32 %v61
  %v64 = vmul.u32.u64.compose %v60, %v55
  %v65 = vextract.low.u32 %v64
  %v66 = vextract.high.u32 %v64
  %v67 = vmul.u32 %v60, %v51
  %v68 = vadd.s32 %v63, %v65
  %vm69 = vc.u32 %v63, %v65
  %v70 = vadd.s32 %v66, 1
  %v71 = vsel %vm69, %v70, %v66
  %v72 = vadd.s32 %v67, %v71
  %v73 = vadd.s32 %v72, 536870912
  %v74 = vshrl.u32 %v73, 30
  %v75 = vshll.u32 %v74, 30
  %v76 = vsub.s32 %v72, %v75
  %vm77 = vcmp.lt.s32.totalorder %v76, 0
  %v78 = vsub.s32 0, %v76
  %v79 = vsel %vm77, %v78, %v76
  %v80 = vclz %v79
  %v81 = vsub.s32 %v80, 2
  %vm82 = vcmp.gt.s32.totalorder 0, %v81
  %v83 = vsel %vm82, 0, %v81
  %v84 = vsub.s32 32, %v83
  %v85 = vshll.u32 %v76, %v83
  %v86 = vshrl.u32 %v68, %v84
  %v87 = vor.u32 %v85, %v86
  %v88 = vsub.s32 4294967266, %v83
  %v89 = vadd.s32 %v88, 127
  %v90 = vshll.u32 %v89, 23
  %v91 = vor.u32 4788187, %v90
  %v92 = vand.u32 2147483647, %v91
  %v94 = vcvt.s32.f32 %v87
  %v95 = vmul.f32 %v94, %v92
  %v96 = vxor.u32 %v95, 2147483648
  %v97 = vsel %vm14, %v96, %v95
  %v98 = vsub.s32 4, %v74
  %v99 = vsel %vm14, %v98, %v74
  %v100 = vsel %vm13, %v10, %v97
  %v101 = vsel %vm13, 0, %v99
  %v102 = vcosq.f32.pop %v100
  %v103 = vsinq.f32.pop %v100
  %vm104 = vweird.f32 %v10
  %v105 = vadd.s32 %v101, 3
  %v106 = vand.u32 %v105, 3
  %vm107 = vcmp.lt.s32.totalorder %v106, 2
  %vm108 = vcmp.eq.s32.totalorder %v106, 0
  %v109 = vxor.u32 %v103, 2147483648
  %v110 = vsel %vm108, %v102, %v109
  %vm111 = vcmp.eq.s32.totalorder %v106, 2
  %v112 = vxor.u32 %v102, 2147483648
  %v113 = vsel %vm111, %v112, %v103
  %v114 = vsel %vm107, %v110, %v113
  %v115 = vsel %vm104, nan, %v114
  %v116 = vand.u32 2147483647, %v11
  %vm117 = vcmp.le.f32.partialorder %v116, 0.7853982
  %vm118 = vcmp.lt.s32.totalorder %v11, 0
  %v119 = vand.u32 %v11, 2139095040
  %v120 = vshrl.u32 %v119, 23
  %v121 = vsub.s32 %v120, 127
  %v122 = vand.u32 2147483647, %v11
  %v123 = vand.u32 %v122, 8388607
  %v124 = vor.u32 %v123, 8388608
  %v125 = vsub.s32 0, %v124
  %v126 = vadd.s32 %v121, 1
  %vm127 = vcmp.gt.s32.totalorder %v126, 0
  %v128 = vsel %vm127, %v126, 0
  %v129 = vshrl.u32 %v128, 5
  %v130 = vand.u32 %v128, 31
  %v131 = vsub.s32 32, %v130
  %v132 = vshrl.u32 683565275, %v131
  %v133 = vshll.u32 683565275, %v130
  %v134 = vshrl.u32 2475754826, %v131
  %v135 = vor.u32 %v133, %v134
  %v136 = vshll.u32 2475754826, %v130
  %v137 = vshrl.u32 2131351028, %v131
  %v138 = vor.u32 %v136, %v137
  %v139 = vshll.u32 2131351028, %v130
  %v140 = vshrl.u32 2102212464, %v131
  %v141 = vor.u32 %v139, %v140
  %v142 = vshll.u32 2102212464, %v130
  %v143 = vshrl.u32 920167782, %v131
  %v144 = vor.u32 %v142, %v143
  %v145 = vshll.u32 920167782, %v130
  %v146 = vshrl.u32 1326507024, %v131
  %v147 = vor.u32 %v145, %v146
  %vm148 = vcmp.lt.s32.totalorder %v129, 1
  %vm149 = vcmp.lt.s32.totalorder %v129, 2
  %vm150 = vcmp.lt.s32.totalorder %v129, 3
  %vm151 = vcmp.lt.s32.totalorder %v129, 4
  %v152 = vsel %vm148, %v132, %v135
  %v153 = vsel %vm151, %v141, 2102212464
  %v154 = vsel %vm150, %v138, %v153
  %v155 = vsel %vm149, %v152, %v154
  %v156 = vsel %vm148, %v135, %v138
  %v157 = vsel %vm151, %v144, 920167782
  %v158 = vsel %vm150, %v141, %v157
  %v159 = vsel %vm149, %v156, %v158
  %v160 = vsel %vm148, %v138, %v141
  %v161 = vsel %vm151, %v147, 1326507024
  %v162 = vsel %vm150, %v144, %v161
  %v163 = vsel %vm149, %v160, %v162
  %v164 = vshll.u32 %v124, 8
  %v165 = vmul.u32.u64.compose %v164, %v163
  %v166 = vextract.low.u32 %v165
  %v167 = vextract.high.u32 %v165
  %v168 = vmul.u32.u64.compose %v164, %v159
  %v169 = vextract.low.u32 %v168
  %v170 = vextract.high.u32 %v168
  %v171 = vmul.u32 %v164, %v155
  %v172 = vadd.s32 %v167, %v169
  %vm173 = vc.u32 %v167, %v169
  %v174 = vadd.s32 %v170, 1
  %v175 = vsel %vm173, %v174, %v170
  %v176 = vadd.s32 %v171, %v175
  %v177 = vadd.s32 %v176, 536870912
  %v178 = vshrl.u32 %v177, 30
  %v179 = vshll.u32 %v178, 30
  %v180 = vsub.s32 %v176, %v179
  %vm181 = vcmp.lt.s32.totalorder %v180, 0
  %v182 = vsub.s32 0, %v180
  %v183 = vsel %vm181, %v182, %v180
  %v184 = vclz %v183
  %v185 = vsub.s32 %v184, 2
  %vm186 = vcmp.gt.s32.totalorder 0, %v185
  %v187 = vsel %vm186, 0, %v185
  %v188 = vsub.s32 32, %v187
  %v189 = vshll.u32 %v180, %v187
  %v190 = vshrl.u32 %v172, %v188
  %v191 = vor.u32 %v189, %v190
  %v192 = vsub.s32 4294967266, %v187
  %v193 = vadd.s32 %v192, 127
  %v194 = vshll.u32 %v193, 23
  %v195 = vor.u32 4788187, %v194
  %v196 = vand.u32 2147483647, %v195
  %v198 = vcvt.s32.f32 %v191
  %v199 = vmul.f32 %v198, %v196
  %v200 = vxor.u32 %v199, 2147483648
  %v201 = vsel %vm118, %v200, %v199
  %v202 = vsub.s32 4, %v178
  %v203 = vsel %vm118, %v202, %v178
  %v204 = vsel %vm117, %v11, %v201
  %v205 = vsel %vm117, 0, %v203
  %v206 = vcosq.f32.pop %v204
  %v207 = vsinq.f32.pop %v204
  %vm208 = vweird.f32 %v11
  %v209 = vadd.s32 %v205, 3
  %v210 = vand.u32 %v209, 3
  %vm211 = vcmp.lt.s32.totalorder %v210, 2
  %vm212 = vcmp.eq.s32.totalorder %v210, 0
  %v213 = vxor.u32 %v207, 2147483648
  %v214 = vsel %vm212, %v206, %v213
  %vm215 = vcmp.eq.s32.totalorder %v210, 2
  %v216 = vxor.u32 %v206, 2147483648
  %v217 = vsel %vm215, %v216, %v207
  %v218 = vsel %vm211, %v214, %v217
  %v219 = vsel %vm208, nan, %v218
  %v220 = vmul.f32 %v115, 2.1213202
  %v221 = vmul.f32 %v219, 2.1213202
  %222 = vst [vmem:[%s1] sm:$0xff] %v220
  %223 = vst [vmem:[%s1 + $0x8] sm:$0xff] %v221
  // Predicated region
  $region6: #{sine_cosine.1} parent=0 // pred_check
    _
  $region7: #{sine_cosine.1} parent=0 // pred_check_branch
    %225 = sbr.rel (0) target = $region9
  $region8: #{sine_cosine.1} parent=0 // pred_region
    _
  $region9: #{sine_cosine.1} parent=0 // pred_fallthru
    _
  // Predicated region
  $region10: #{sine_cosine.1} parent=0 // pred_check
    _
  $region11: #{sine_cosine.1} parent=0 // pred_check_branch
    %227 = sbr.rel (0) target = $region13
  $region12: #{sine_cosine.1} parent=0 // pred_region
    _
  $region13: #{sine_cosine.1} parent=0 // pred_fallthru
    _

</llo_original>
